<compile_context>
chip_gen: v7x
topology: tpu7x:2x2x1
jax: 0.10.0
libtpu: 0.0.40
codegen_flags: <defaults>
</compile_context>

<pallas_src>
import math

import jax
import jax.numpy as jnp
from jax.experimental import pallas as pl
from jax.experimental.pallas import tpu as pltpu


def _pseudo_embedding_kernel(idx_ref, o_ref):
    # idx_ref: (tr, P) int32  -- P tokens per output row (P >= 1)
    # o_ref:   (tr, P * D)    -- synthesized embeddings, token p occupies lanes [p*D, (p+1)*D)
    idx = idx_ref[...]                      # (tr, P) int32
    tr, P = idx.shape
    L = o_ref.shape[-1]
    D = L // P

    if P == 1:
        # Direct synthesis: value at lane 0 is the index, everything else 0 (pure VPU).
        lane = jax.lax.broadcasted_iota(jnp.int32, (tr, L), 1)
        o_ref[...] = jnp.where(lane == 0, idx, 0).astype(o_ref.dtype)
    else:
        # Packed synthesis: place idx[r, p] at lane p*D via a tiny selection matmul.
        # sel[p, l] = 1.0 iff l == p*D  ->  (tr, P) @ (P, L) puts each index at its
        # token's first lane and zeros elsewhere.  Single nonzero product => exact f32
        # (same integer-in-float precision as the reference frozen table).
        lane = jax.lax.broadcasted_iota(jnp.int32, (P, L), 1)
        tok = jax.lax.broadcasted_iota(jnp.int32, (P, L), 0)
        sel = (lane == tok * D).astype(jnp.float32)
        o_ref[...] = jnp.dot(idx.astype(jnp.float32), sel,
                             preferred_element_type=jnp.float32).astype(o_ref.dtype)


def pseudo_embedding(x, dim, *, out_dtype=jnp.float32, block_rows=1024):
    """PseudoEmbedding forward: x (any int shape) -> x.shape + (dim,) with
    out[..., 0] = x and out[..., 1:] = 0 (exactly nn.Embedding over the frozen table)."""
    orig_shape = x.shape
    D = int(dim)
    idx = x.reshape(-1).astype(jnp.int32)
    N = idx.shape[0]
    if N == 0:
        return jnp.zeros(orig_shape + (D,), dtype=out_dtype)

    # Lane-dense packing: each output row is L = lcm(D, 128) lanes and carries
    # P = L // D tokens, so every store is an unmasked full-lane vst.
    g = math.gcd(D, 128)
    P = 128 // g
    L = P * D

    # Row tile: large by default, bounded by a ~4 MiB-per-output-buffer VMEM budget
    # (double-buffered => ~8 MiB, safe under default scoped VMEM on v5e/v6e/v7x)
    # and by the rows actually needed (avoids padded work for tiny inputs).
    itemsize = jnp.dtype(out_dtype).itemsize
    max_rows_vmem = max(8, (4 * 1024 * 1024) // (L * itemsize))
    needed_rows = pl.cdiv(N, P)
    block_rows = min(block_rows, max_rows_vmem, ((needed_rows + 7) // 8) * 8)
    block_rows = max(8, (block_rows // 8) * 8)

    # Pad the flat token stream so it tiles evenly into (block_rows, P) index blocks.
    tokens_per_block = block_rows * P
    pad = (-N) % tokens_per_block
    if pad:
        idx = jnp.pad(idx, (0, pad))
    Np = idx.shape[0]
    rows = Np // P
    idx2 = idx.reshape(rows, P)
    n_blocks = rows // block_rows

    out = pl.pallas_call(
        _pseudo_embedding_kernel,
        out_shape=jax.ShapeDtypeStruct((rows, L), out_dtype),
        grid_spec=pltpu.PrefetchScalarGridSpec(
            num_scalar_prefetch=0,
            grid=(n_blocks,),
            in_specs=[pl.BlockSpec((block_rows, P), lambda i: (i, 0))],
            out_specs=pl.BlockSpec((block_rows, L), lambda i: (i, 0)),
        ),
        compiler_params=pltpu.CompilerParams(
            dimension_semantics=("parallel",)),
    )(idx2)

    # (rows, P*D) row-major flatten is exactly token-major (Np, D).
    out = out.reshape(Np, D)[:N].reshape(*orig_shape, D)
    return out


def make_pseudo_embedding_weights(vocab_size: int, dim: int):
    # Reference table, identical to the PyTorch __init__: W[i, 0] = i, else 0.
    w = jnp.zeros((vocab_size, dim), dtype=jnp.float32)
    w = w.at[:, 0].set(jnp.arange(vocab_size, dtype=jnp.float32))
    return w


if __name__ == "__main__":
    key = jax.random.PRNGKey(0)
    batch, seq = 2, 8

    # (vocab_size, dim) configs exercising all packing regimes:
    #   dim=32  -> 128 % D == 0, P=4,  L=128
    #   dim=48  -> lcm path,     P=8,  L=384
    #   dim=128 -> D % 128 == 0, P=1,  L=128
    configs = [(16, 32), (32, 48), (64, 128)]

    for i, (vocab_size, dim) in enumerate(configs):
        k = jax.random.fold_in(key, i)
        x = jax.random.randint(k, (batch, seq), 0, vocab_size, dtype=jnp.int32)

        out = jax.block_until_ready(pseudo_embedding(x, dim))

        # Reference: actual frozen-table gather (== nn.Embedding forward).
        w = make_pseudo_embedding_weights(vocab_size, dim)
        ref = jnp.take(w, x, axis=0)

        assert out.shape == (batch, seq, dim), (out.shape, dim)
        assert out.dtype == ref.dtype
        assert jnp.array_equal(out, ref), f"mismatch vs reference embedding (dim={dim})"

    print("KERNEL_OK")
</pallas_src>

<mosaic_0001>
module attributes {stable_mosaic.version = 11 : i64} {
  func.func @_pseudo_embedding_kernel(%arg0: i32, %arg1: memref<8x4xi32, #tpu.memory_space<vmem>>, %arg2: memref<8x128xf32, #tpu.memory_space<vmem>>) attributes {dimension_semantics = [#tpu.dimension_semantics<parallel>], iteration_bounds = array<i64: 1>, scalar_prefetch = 0 : i64, scratch_operands = 0 : i64, tpu.core_type = #tpu.core_type<tc>, window_params = [{transform_indices = @transform_0, window_bounds = array<i64: 8, 4>}, {transform_indices = @transform_1, window_bounds = array<i64: 8, 128>}]} {
    %c0 = arith.constant 0 : index
    %c0_0 = arith.constant 0 : index
    %0 = vector.load %arg1[%c0, %c0_0] : memref<8x4xi32, #tpu.memory_space<vmem>>, vector<8x4xi32>
    %1 = tpu.iota {dimensions = array<i32: 1>} : vector<4x128xi32>
    %2 = tpu.iota {dimensions = array<i32: 0>} : vector<4x128xi32>
    %c32_i32 = arith.constant 32 : i32
    %3 = vector.broadcast %c32_i32 : i32 to vector<4x128xi32>
    %4 = arith.muli %2, %3 : vector<4x128xi32>
    %5 = arith.cmpi eq, %1, %4 : vector<4x128xi32>
    %6 = arith.extui %5 : vector<4x128xi1> to vector<4x128xi32>
    %7 = arith.sitofp %6 : vector<4x128xi32> to vector<4x128xf32>
    %8 = arith.sitofp %0 : vector<8x4xi32> to vector<8x4xf32>
    %cst = arith.constant dense<0.000000e+00> : vector<8x128xf32>
    %9 = tpu.matmul %8, %7, %cst {dimension_numbers = #tpu.dot_dimension_numbers<[1], [0], [0], [1], [0, 0, 1, 1], [], []>} : vector<8x4xf32>, vector<4x128xf32>, vector<8x128xf32> -> vector<8x128xf32>
    %c0_1 = arith.constant 0 : index
    %c0_2 = arith.constant 0 : index
    %10 = vector.load %arg2[%c0_1, %c0_2] : memref<8x128xf32, #tpu.memory_space<vmem>>, vector<8x128xf32>
    tpu.vector_store %arg2[%c0_1, %c0_2], %9 {strides = array<i32>} : memref<8x128xf32, #tpu.memory_space<vmem>>, vector<8x128xf32>,
    return
  }
  func.func @transform_0(%arg0: i32) -> (i32, i32) {
    %c0_i32 = arith.constant 0 : i32
    %c0_i32_0 = arith.constant 0 : i32
    return %arg0, %c0_i32 : i32, i32
  }
  func.func @transform_1(%arg0: i32) -> (i32, i32) {
    %c0_i32 = arith.constant 0 : i32
    %c0_i32_0 = arith.constant 0 : i32
    return %arg0, %c0_i32 : i32, i32
  }
}

</mosaic_0001>

<llo_original>
// kernel: tpu_custom_call.1
$region0: #{tpu_custom_call.1}
  #allocation0 [shape = 'u32[]', space=smem, size = 0x4, offset = 0x4, fixed_abs, tag = 'smem constant byte address 0x4 - core index']
  #allocation1 [shape = 'u32[144,128]{1,0:T(1,128)}', space=vmem, size = 0x12000, scoped, tag = 'internal scratch']
  %s0 = inlined_call_operand.vmem [shape: s32[8,4], index: 0, kind: input, shape index: {}]
  %s1 = inlined_call_operand.hbm [shape: f32[8,128], index: 1, kind: output, shape index: {}]
  %s2 = sld [smem:[#allocation0]]
  $region14: #{tpu_custom_call.1} parent=0
    _
  %s4 = ssub.s32 1, %s2
  %s5 = scalar_select 0, %s4, %s2
  $region1: #{tpu_custom_call.1} parent=0
    #allocation2 [shape = 'u8[4096]{0}', space=vmem, size = 0x1000, scoped, tag = 'output window, operand 0, single buffered']
    #allocation3 [shape = 's32[1]{0}', space=sflag, size = 0x4, scoped, tag = 'scoped memory for tpu_custom_call.1']
    %6 = vsyncpa [#allocation3], 0
    // Predicated region
    $region2: #{tpu_custom_call.1} parent=1 // pred_check
      _
    $region3: #{tpu_custom_call.1} parent=1 // pred_check_branch
      %8 = sbr.rel (0) target = $region5
    $region4: #{tpu_custom_call.1} parent=1 // pred_region
      _
    $region5: #{tpu_custom_call.1} parent=1 // pred_fallthru
      _
    %v9 = vld [vmem:[%s0] sm:$0xff]
    %v10 = vlaneseq
    %v11 = vand.u32 %v10, 127
    %v12 = vlaneseq
    %v13 = vshrl.u32 %v12, 7
    %v14 = vmul.u32 %v13, 32
    %vm15 = vcmp.eq.s32.totalorder %v11, %v14
    %v16 = vsel %vm15, 1, 0
    %v17 = vcvt.s32.f32 %v16
    %v18 = vcvt.s32.f32 %v9
    %vm19 = vcmask 31744
    %v21 = vsel %vm19, %v18, 0
    %vm23 = vcmask 1043456
    %v25 = vsel %vm23, %v17, 0
    %27 = vmatprep.subr.mxu0 0.0
    %28 = vmatpush1.msra.mxu0 %v25
    %29 = vmatprep.subr.mxu0 0.0
    %30 = vmatpush1.msra.mxu0 0.0
    %31 = vmatprep.subr.mxu0 0.0
    %32 = vmatpush1.msra.mxu0 0.0
    %33 = vmatprep.subr.mxu0 0.0
    %34 = vmatpush1.msra.mxu0 0.0
    %35 = vmatprep.subr.mxu0 0.0
    %36 = vmatpush1.msra.mxu0 0.0
    %37 = vmatprep.subr.mxu0 0.0
    %38 = vmatpush1.msra.mxu0 0.0
    %39 = vmatprep.subr.mxu0 0.0
    %40 = vmatpush1.msra.mxu0 0.0
    %41 = vmatprep.subr.mxu0 0.0
    %42 = vmatpush1.msra.mxu0 0.0
    %43 = vmatprep.subr.mxu0 0.0
    %44 = vmatpush1.msra.mxu0 0.0
    %45 = vmatprep.subr.mxu0 0.0
    %46 = vmatpush1.msra.mxu0 0.0
    %47 = vmatprep.subr.mxu0 0.0
    %48 = vmatpush1.msra.mxu0 0.0
    %49 = vmatprep.subr.mxu0 0.0
    %50 = vmatpush1.msra.mxu0 0.0
    %51 = vmatprep.subr.mxu0 0.0
    %52 = vmatpush1.msra.mxu0 0.0
    %53 = vmatprep.subr.mxu0 0.0
    %54 = vmatpush1.msra.mxu0 0.0
    %55 = vmatprep.subr.mxu0 0.0
    %56 = vmatpush1.msra.mxu0 0.0
    %57 = vmatprep.subr.mxu0 0.0
    %58 = vmatpush1.msra.mxu0 0.0
    %59 = vmatprep.subr.mxu0 0.0
    %60 = vmatpush1.msra.mxu0 0.0
    %61 = vmatprep.subr.mxu0 0.0
    %62 = vmatpush1.msra.mxu0 0.0
    %63 = vmatprep.subr.mxu0 0.0
    %64 = vmatpush1.msra.mxu0 0.0
    %65 = vmatprep.subr.mxu0 0.0
    %66 = vmatpush1.msra.mxu0 0.0
    %67 = vmatprep.subr.mxu0 0.0
    %68 = vmatpush1.msra.mxu0 0.0
    %69 = vmatprep.subr.mxu0 0.0
    %70 = vmatpush1.msra.mxu0 0.0
    %71 = vmatprep.subr.mxu0 0.0
    %72 = vmatpush1.msra.mxu0 0.0
    %73 = vmatprep.subr.mxu0 0.0
    %74 = vmatpush1.msra.mxu0 0.0
    %75 = vmatprep.subr.mxu0 0.0
    %76 = vmatpush1.msra.mxu0 0.0
    %77 = vmatprep.subr.mxu0 0.0
    %78 = vmatpush1.msra.mxu0 0.0
    %79 = vmatprep.subr.mxu0 0.0
    %80 = vmatpush1.msra.mxu0 0.0
    %81 = vmatprep.subr.mxu0 0.0
    %82 = vmatpush1.msra.mxu0 0.0
    %83 = vmatprep.subr.mxu0 0.0
    %84 = vmatpush1.msra.mxu0 0.0
    %85 = vmatprep.subr.mxu0 0.0
    %86 = vmatpush1.msra.mxu0 0.0
    %87 = vmatprep.subr.mxu0 0.0
    %88 = vmatpush1.msra.mxu0 0.0
    %89 = vmatprep.subr.mxu0 0.0
    %90 = vmatpush1.msra.mxu0 0.0
    %91 = vmatprep.mubr.f32.mxu0 0.0
    %92 = vmatmul.mubr.f32.gmra.mrb[0].mxu0 %v21
    %v93 = vpop.f32.mrb[0].mxu0
    %v94 = vadd.f32 0.0, %v93
    %v95 = vpop.f32.mrb[0].mxu0
    %96 = vdwg.mxu0
    %97 = vst [vmem:[#allocation2] sm:$0xff] %v94
    // Predicated region
    $region6: #{tpu_custom_call.1} parent=1 // pred_check
      _
    $region7: #{tpu_custom_call.1} parent=1 // pred_check_branch
      %99 = sbr.rel (0) target = $region9
    $region8: #{tpu_custom_call.1} parent=1 // pred_region
      %s101 = ssub.s32 128, 128
      %102 = vsyncadd [#allocation3], %s101
      %s104 = sshll.u32 [#allocation2], 4
      %s105 = int_to_ptr.vmem [resolvable:$true] %s104
      %107 = dma.vmem_to_hbm [thread:$0]  %s105, 128, %s1, [#allocation3]
    $region9: #{tpu_custom_call.1} parent=1 // pred_fallthru
      _
    // Predicated region
    $region10: #{tpu_custom_call.1} parent=1 // pred_check
      _
    $region11: #{tpu_custom_call.1} parent=1 // pred_check_branch
      %109 = sbr.rel (0) target = $region13
    $region12: #{tpu_custom_call.1} parent=1 // pred_region
      %110 = dma.done [#allocation3], 128
    $region13: #{tpu_custom_call.1} parent=1 // pred_fallthru
      _
    %111 = vsyncpa [#allocation3], 1

</llo_original>
